<compile_context>
chip_gen: v6e
topology: v6e:2x2x1
jax: 0.10.0
libtpu: 0.0.40
codegen_flags: <defaults>
</compile_context>

<pallas_src>
import jax
import jax.numpy as jnp
import numpy as np
from jax.experimental import pallas as pl
from jax.experimental.pallas import tpu as pltpu


def _round_up(x, m):
    return ((x + m - 1) // m) * m


def _batch_tiling(b, block_b):
    """Bucketed padded batch + tile so distinct B values share compiles."""
    if b <= block_b:
        padded_b = max(16, int(pl.next_power_of_2(b)))
        tb = padded_b
    else:
        padded_b = _round_up(b, block_b)
        tb = block_b
    # Give the grid >= 2 steps for big batches so the "parallel" axis can be
    # sharded across both v7x TensorCores (negligible overhead on 1-TC chips).
    if padded_b >= 1024 and padded_b // tb < 2:
        tb //= 2
    return padded_b, tb, padded_b // tb


def _critic_kernel(sa_ref, wblk_ref, bias_ref, w2h_ref, w3_ref, b3_ref,
                   out_ref):
    hidden = w2h_ref.shape[0]

    # Fused layer-1 + action projection: one (tb, K) @ (K, 2*hidden) MXU pass,
    # f32 accumulation, fused [b1 | b2] bias row.
    z = jnp.dot(sa_ref[...], wblk_ref[...], preferred_element_type=jnp.float32)
    z = z + bias_ref[...]                           # (tb, 2*hidden)

    h = jnp.maximum(z[:, :hidden], 0.0)             # relu(state @ W1 + b1)

    # Layer 2: MXU matmul on the hidden part; action@W2a + b2 already in z.
    h2 = jnp.dot(h.astype(w2h_ref.dtype), w2h_ref[...],
                 preferred_element_type=jnp.float32)
    h2 = jnp.maximum(h2 + z[:, hidden:], 0.0)

    # Q head (N = 1): VPU multiply + cross-lane reduction, (tb, 1) block.
    q = jnp.sum(h2 * w3_ref[...], axis=-1, keepdims=True)
    out_ref[...] = q + b3_ref[0, 0]


def pack_critic_params(params, compute_dtype=jnp.bfloat16):
    """Raw [in, out] params -> kernel operands (block weight, fused biases)."""
    w1, b1, w2h, w2a, b2, w3, b3 = params
    state_dim, hidden = w1.shape
    action_dim = w2a.shape[0]
    wblk = jnp.zeros((state_dim + action_dim, 2 * hidden), jnp.float32)
    wblk = wblk.at[:state_dim, :hidden].set(w1)
    wblk = wblk.at[state_dim:, hidden:].set(w2a)
    bias_row = jnp.concatenate([b1, b2], axis=1)     # (1, 2*hidden), f32
    return (wblk.astype(compute_dtype), bias_row,
            w2h.astype(compute_dtype),
            w3.astype(jnp.float32), b3.astype(jnp.float32))


def critic_forward(state, action, params, *, block_b=2048,
                   compute_dtype=jnp.bfloat16):
    """state: [B, state_dim], action: [B, action_dim] -> q: [B, 1] (float32)."""
    b, state_dim = state.shape
    action_dim = action.shape[1]
    wblk, bias_row, w2h, w3, b3 = pack_critic_params(params, compute_dtype)
    hidden = w2h.shape[0]
    k = state_dim + action_dim

    padded_b, tb, grid = _batch_tiling(b, block_b)

    sa = jnp.concatenate([state, action], axis=1)
    if padded_b != b:
        sa = jnp.pad(sa, ((0, padded_b - b), (0, 0)))
    sa = sa.astype(compute_dtype)

    def resident(shape):
        # Constant block index -> stays resident in VMEM across grid steps.
        return pl.BlockSpec(shape, lambda i: (0,) * len(shape))

    flops = 2 * padded_b * (k * 2 * hidden + hidden * hidden + hidden)
    bytes_accessed = (sa.size * sa.dtype.itemsize + padded_b * 4
                      + wblk.size * wblk.dtype.itemsize
                      + w2h.size * w2h.dtype.itemsize
                      + (bias_row.size + w3.size + 1) * 4)
    cost = pl.CostEstimate(flops=int(flops), transcendentals=0,
                           bytes_accessed=int(bytes_accessed))

    out = pl.pallas_call(
        _critic_kernel,
        out_shape=jax.ShapeDtypeStruct((padded_b, 1), jnp.float32),
        grid=(grid,),
        in_specs=[
            pl.BlockSpec((tb, k), lambda i: (i, 0)),            # [state|action]
            resident((k, 2 * hidden)),                          # [[W1,0],[0,W2a]]
            resident((1, 2 * hidden)),                          # [b1 | b2]
            resident((hidden, hidden)),                         # W2 hidden part
            resident((1, hidden)),                              # W3 row (f32)
            pl.BlockSpec(memory_space=pltpu.MemorySpace.SMEM),  # b3 scalar
        ],
        out_specs=pl.BlockSpec((tb, 1), lambda i: (i, 0)),
        compiler_params=pltpu.CompilerParams(
            dimension_semantics=("parallel",)),
        cost_estimate=cost,
    )(sa, wblk, bias_row, w2h, w3, b3)

    return out[:b]


def init_critic_params(key, state_dim, action_dim, hidden=128):
    """Deterministic init matching the PyTorch module's init ranges.

    _hidden_init uses weight.size()[0] == out_features (=128), so both hidden
    layers (weights and biases) use +/- 1/sqrt(128); the Q head uses +/- 3e-4.
    Weights are stored [in, out]; W2 is kept split into hidden/action blocks.
    """
    k1, k2, k3, k4, k5, k6, k7 = jax.random.split(key, 7)
    lim_h = 1.0 / np.sqrt(hidden)

    w1 = jax.random.uniform(k1, (state_dim, hidden), jnp.float32, -lim_h, lim_h)
    b1 = jax.random.uniform(k2, (1, hidden), jnp.float32, -lim_h, lim_h)

    w2h = jax.random.uniform(k3, (hidden, hidden), jnp.float32, -lim_h, lim_h)
    w2a = jax.random.uniform(k4, (action_dim, hidden), jnp.float32, -lim_h, lim_h)
    b2 = jax.random.uniform(k5, (1, hidden), jnp.float32, -lim_h, lim_h)

    lim_q = 3e-4
    w3 = jax.random.uniform(k6, (1, hidden), jnp.float32, -lim_q, lim_q)
    b3 = jax.random.uniform(k7, (1, 1), jnp.float32, -lim_q, lim_q)

    return (w1, b1, w2h, w2a, b2, w3, b3)


def critic_reference(state, action, params):
    """Pure-JAX reference mirroring the PyTorch forward exactly (f32)."""
    w1, b1, w2h, w2a, b2, w3, b3 = params
    x = jnp.maximum(state @ w1 + b1, 0.0)
    x = jnp.concatenate([x, action], axis=1)
    w2_full = jnp.concatenate([w2h, w2a], axis=0)
    x = jnp.maximum(x @ w2_full + b2, 0.0)
    return x @ w3.T + b3


if __name__ == "__main__":
    # Small shapes consistent with the module (Tennis env: state=24, action=2).
    batch, state_dim, action_dim = 8, 24, 2

    key = jax.random.PRNGKey(0)
    k_state, k_action, k_params, k_state2, k_action2 = jax.random.split(key, 5)

    state = jax.random.normal(k_state, (batch, state_dim), jnp.float32)
    action = jax.random.uniform(k_action, (batch, action_dim), jnp.float32,
                                -1.0, 1.0)
    params = init_critic_params(k_params, state_dim, action_dim)
    q_ref = critic_reference(state, action, params)

    # f32 matmul path: structurally exact vs. the reference.
    q32 = jax.block_until_ready(
        critic_forward(state, action, params, compute_dtype=jnp.float32))
    np.testing.assert_allclose(np.asarray(q32), np.asarray(q_ref),
                               rtol=1e-5, atol=1e-5)

    # Default bf16-matmul path (MXU-native); intentionally looser tolerance.
    qbf = jax.block_until_ready(critic_forward(state, action, params))
    np.testing.assert_allclose(np.asarray(qbf), np.asarray(q_ref),
                               rtol=3e-2, atol=1e-3)

    # Ragged batch (B=10): exercises the bucketed pad + slice; buckets to the
    # same padded shape as B=8, so no fresh compile for the block shape.
    state2 = jax.random.normal(k_state2, (10, state_dim), jnp.float32)
    action2 = jax.random.uniform(k_action2, (10, action_dim), jnp.float32,
                                 -1.0, 1.0)
    q2 = jax.block_until_ready(
        critic_forward(state2, action2, params, compute_dtype=jnp.float32))
    np.testing.assert_allclose(
        np.asarray(q2), np.asarray(critic_reference(state2, action2, params)),
        rtol=1e-5, atol=1e-5)

    print("KERNEL_OK")
</pallas_src>

<mosaic_0001>
module attributes {stable_mosaic.version = 11 : i64} {
  func.func @_critic_kernel(%arg0: i32, %arg1: memref<16x26xf32, #tpu.memory_space<vmem>>, %arg2: memref<26x256xf32, #tpu.memory_space<vmem>>, %arg3: memref<1x256xf32, #tpu.memory_space<vmem>>, %arg4: memref<128x128xf32, #tpu.memory_space<vmem>>, %arg5: memref<1x128xf32, #tpu.memory_space<vmem>>, %arg6: memref<1x1xf32, #tpu.memory_space<smem>>, %arg7: memref<16x1xf32, #tpu.memory_space<vmem>>) attributes {dimension_semantics = [#tpu.dimension_semantics<parallel>], iteration_bounds = array<i64: 1>, scalar_prefetch = 0 : i64, scratch_operands = 0 : i64, tpu.core_type = #tpu.core_type<tc>, window_params = [{transform_indices = @transform_0, window_bounds = array<i64: 16, 26>}, {pipeline_mode = #tpu.pipeline_mode<synchronous>, transform_indices = @transform_1, window_bounds = array<i64: 26, 256>}, {pipeline_mode = #tpu.pipeline_mode<synchronous>, transform_indices = @transform_2, window_bounds = array<i64: 1, 256>}, {pipeline_mode = #tpu.pipeline_mode<synchronous>, transform_indices = @transform_3, window_bounds = array<i64: 128, 128>}, {pipeline_mode = #tpu.pipeline_mode<synchronous>, transform_indices = @transform_4, window_bounds = array<i64: 1, 128>}, {transform_indices = @transform_5, window_bounds = array<i64: 1, 1>}, {transform_indices = @transform_6, window_bounds = array<i64: 16, 1>}]} {
    %c0 = arith.constant 0 : index
    %c0_0 = arith.constant 0 : index
    %0 = vector.load %arg1[%c0, %c0_0] : memref<16x26xf32, #tpu.memory_space<vmem>>, vector<16x26xf32>
    %c0_1 = arith.constant 0 : index
    %c0_2 = arith.constant 0 : index
    %1 = vector.load %arg2[%c0_1, %c0_2] : memref<26x256xf32, #tpu.memory_space<vmem>>, vector<26x256xf32>
    %cst = arith.constant dense<0.000000e+00> : vector<16x256xf32>
    %2 = tpu.matmul %0, %1, %cst {dimension_numbers = #tpu.dot_dimension_numbers<[1], [0], [0], [1], [0, 0, 1, 1], [], []>} : vector<16x26xf32>, vector<26x256xf32>, vector<16x256xf32> -> vector<16x256xf32>
    %c0_3 = arith.constant 0 : index
    %c0_4 = arith.constant 0 : index
    %3 = vector.load %arg3[%c0_3, %c0_4] : memref<1x256xf32, #tpu.memory_space<vmem>>, vector<1x256xf32>
    %4 = vector.broadcast %3 : vector<1x256xf32> to vector<16x256xf32>
    %5 = arith.addf %2, %4 : vector<16x256xf32>
    %6 = vector.extract_strided_slice %5 {offsets = [0, 0], sizes = [16, 128], strides = [1, 1]} : vector<16x256xf32> to vector<16x128xf32>
    %cst_5 = arith.constant 0.000000e+00 : f32
    %7 = vector.broadcast %cst_5 : f32 to vector<16x128xf32>
    %8 = arith.maximumf %6, %7 : vector<16x128xf32>
    %c0_6 = arith.constant 0 : index
    %c0_7 = arith.constant 0 : index
    %9 = vector.load %arg4[%c0_6, %c0_7] : memref<128x128xf32, #tpu.memory_space<vmem>>, vector<128x128xf32>
    %cst_8 = arith.constant dense<0.000000e+00> : vector<16x128xf32>
    %10 = tpu.matmul %8, %9, %cst_8 {dimension_numbers = #tpu.dot_dimension_numbers<[1], [0], [0], [1], [0, 0, 1, 1], [], []>} : vector<16x128xf32>, vector<128x128xf32>, vector<16x128xf32> -> vector<16x128xf32>
    %11 = vector.extract_strided_slice %5 {offsets = [0, 128], sizes = [16, 128], strides = [1, 1]} : vector<16x256xf32> to vector<16x128xf32>
    %12 = arith.addf %10, %11 : vector<16x128xf32>
    %cst_9 = arith.constant 0.000000e+00 : f32
    %13 = vector.broadcast %cst_9 : f32 to vector<16x128xf32>
    %14 = arith.maximumf %12, %13 : vector<16x128xf32>
    %c0_10 = arith.constant 0 : index
    %c0_11 = arith.constant 0 : index
    %15 = vector.load %arg5[%c0_10, %c0_11] : memref<1x128xf32, #tpu.memory_space<vmem>>, vector<1x128xf32>
    %16 = vector.broadcast %15 : vector<1x128xf32> to vector<16x128xf32>
    %17 = arith.mulf %14, %16 : vector<16x128xf32>
    %cst_12 = arith.constant dense<0.000000e+00> : vector<16xf32>
    %18 = vector.multi_reduction <add>, %17, %cst_12 [1] : vector<16x128xf32> to vector<16xf32>
    %19 = vector.shape_cast %18 : vector<16xf32> to vector<16x1xf32>
    %c0_13 = arith.constant 0 : index
    %c0_14 = arith.constant 0 : index
    %20 = memref.load %arg6[%c0_13, %c0_14] : memref<1x1xf32, #tpu.memory_space<smem>>
    %21 = vector.broadcast %20 : f32 to vector<16x1xf32>
    %22 = arith.addf %19, %21 : vector<16x1xf32>
    %c0_15 = arith.constant 0 : index
    %c0_16 = arith.constant 0 : index
    %23 = vector.load %arg7[%c0_15, %c0_16] : memref<16x1xf32, #tpu.memory_space<vmem>>, vector<16x1xf32>
    tpu.vector_store %arg7[%c0_15, %c0_16], %22 {strides = array<i32>} : memref<16x1xf32, #tpu.memory_space<vmem>>, vector<16x1xf32>,
    return
  }
  func.func @transform_0(%arg0: i32) -> (i32, i32) {
    %c0_i32 = arith.constant 0 : i32
    %c0_i32_0 = arith.constant 0 : i32
    return %arg0, %c0_i32 : i32, i32
  }
  func.func @transform_1(%arg0: i32) -> (i32, i32) {
    %c0_i32 = arith.constant 0 : i32
    %c0_i32_0 = arith.constant 0 : i32
    %c0_i32_1 = arith.constant 0 : i32
    return %c0_i32, %c0_i32_0 : i32, i32
  }
  func.func @transform_2(%arg0: i32) -> (i32, i32) {
    %c0_i32 = arith.constant 0 : i32
    %c0_i32_0 = arith.constant 0 : i32
    %c0_i32_1 = arith.constant 0 : i32
    return %c0_i32, %c0_i32_0 : i32, i32
  }
  func.func @transform_3(%arg0: i32) -> (i32, i32) {
    %c0_i32 = arith.constant 0 : i32
    %c0_i32_0 = arith.constant 0 : i32
    %c0_i32_1 = arith.constant 0 : i32
    return %c0_i32, %c0_i32_0 : i32, i32
  }
  func.func @transform_4(%arg0: i32) -> (i32, i32) {
    %c0_i32 = arith.constant 0 : i32
    %c0_i32_0 = arith.constant 0 : i32
    %c0_i32_1 = arith.constant 0 : i32
    return %c0_i32, %c0_i32_0 : i32, i32
  }
  func.func @transform_5(%arg0: i32) -> (i32, i32) {
    %c0_i32 = arith.constant 0 : i32
    %c0_i32_0 = arith.constant 0 : i32
    %c0_i32_1 = arith.constant 0 : i32
    return %c0_i32, %c0_i32_0 : i32, i32
  }
  func.func @transform_6(%arg0: i32) -> (i32, i32) {
    %c0_i32 = arith.constant 0 : i32
    %c0_i32_0 = arith.constant 0 : i32
    return %arg0, %c0_i32 : i32, i32
  }
}

</mosaic_0001>

<llo_original>
// kernel: tpu_custom_call.1
$region0: #{tpu_custom_call.1}
  #allocation0 [shape = 'u32[]', space=smem, size = 0x4, offset = 0x4, fixed_abs, tag = 'smem constant byte address 0x4 - core index']
  #allocation1 [shape = 'u32[144,128]{1,0:T(1,128)}', space=vmem, size = 0x12000, scoped, tag = 'internal scratch']
  #allocation2 [shape = 'f32[1,1]{1,0:T(1,128)S(6)}', space=smem, size = 0x200, scoped, tag = 'scoped memory for tpu_custom_call.1']
  %s0 = inlined_call_operand.hbm [shape: f32[16,26], index: 0, kind: input, shape index: {}]
  %s1 = inlined_call_operand.hbm [shape: f32[26,256], index: 1, kind: input, shape index: {}]
  %s2 = inlined_call_operand.vmem [shape: f32[1,256], index: 2, kind: input, shape index: {}]
  %s3 = inlined_call_operand.hbm [shape: f32[128,128], index: 3, kind: input, shape index: {}]
  %s4 = inlined_call_operand.vmem [shape: f32[1,128], index: 4, kind: input, shape index: {}]
  %s5 = inlined_call_operand.<no memory space> [shape: f32[1,1], index: 5, kind: input, shape index: {}]
  %s6 = inlined_call_operand.vmem [shape: f32[16,1], index: 6, kind: output, shape index: {}]
  %s7 = sld [smem:[#allocation0]]
  $region46: #{tpu_custom_call.1} parent=0
    _
  %s9 = ssub.s32 1, %s7
  %s10 = scalar_select 0, %s9, %s7
  %11 = sst [smem:[#allocation2]] %s5
  $region1: #{tpu_custom_call.1} parent=0
    #allocation3 [shape = 'u8[8192]{0}', space=vmem, size = 0x2000, scoped, tag = 'input window, operand 0, single buffered']
    #allocation4 [shape = 's32[1]{0}', space=sflag, size = 0x4, scoped, tag = 'scoped memory for tpu_custom_call.1']
    #allocation5 [shape = 'u8[32768]{0}', space=vmem, size = 0x8000, scoped, tag = 'input window, operand 1, single buffered']
    #allocation6 [shape = 's32[1]{0}', space=sflag, size = 0x4, scoped, tag = 'scoped memory for tpu_custom_call.1']
    #allocation7 [shape = 'u8[65536]{0}', space=vmem, size = 0x10000, scoped, tag = 'input window, operand 3, single buffered']
    %12 = vsyncpa [#allocation4], 0
    %13 = vsyncpa [#allocation6], 0
    // Predicated region
    $region2: #{tpu_custom_call.1} parent=1 // pred_check
      _
    $region3: #{tpu_custom_call.1} parent=1 // pred_check_branch
      %15 = sbr.rel (0) target = $region5
    $region4: #{tpu_custom_call.1} parent=1 // pred_region
      %s17 = ssub.s32 256, 256
      %18 = vsyncadd [#allocation4], %s17
      %s19 = sshll.u32 [#allocation3], 4
      %s20 = int_to_ptr.vmem [resolvable:$true] %s19
      %25 = dma.hbm_to_vmem [thread:$0]  %s0, 256, %s20, [#allocation4], 128, 128, 8
    $region5: #{tpu_custom_call.1} parent=1 // pred_fallthru
      _
    // Predicated region
    $region6: #{tpu_custom_call.1} parent=1 // pred_check
      _
    $region7: #{tpu_custom_call.1} parent=1 // pred_check_branch
      %27 = sbr.rel (0) target = $region9
    $region8: #{tpu_custom_call.1} parent=1 // pred_region
      %s29 = ssub.s32 1024, 1024
      %30 = vsyncadd [#allocation6], %s29
      %s31 = sshll.u32 [#allocation5], 4
      %s32 = int_to_ptr.vmem [resolvable:$true] %s31
      %37 = dma.hbm_to_vmem [thread:$0]  %s1, 1024, %s32, [#allocation6], 256, 256, 16
    $region9: #{tpu_custom_call.1} parent=1 // pred_fallthru
      _
    // Predicated region
    $region10: #{tpu_custom_call.1} parent=1 // pred_check
      _
    $region11: #{tpu_custom_call.1} parent=1 // pred_check_branch
      %39 = sbr.rel (0) target = $region13
    $region12: #{tpu_custom_call.1} parent=1 // pred_region
      _
    $region13: #{tpu_custom_call.1} parent=1 // pred_fallthru
      _
    // Predicated region
    $region14: #{tpu_custom_call.1} parent=1 // pred_check
      _
    $region15: #{tpu_custom_call.1} parent=1 // pred_check_branch
      %41 = sbr.rel (0) target = $region17
    $region16: #{tpu_custom_call.1} parent=1 // pred_region
      %s43 = ssub.s32 2048, 2048
      %44 = vsyncadd [#allocation6], %s43
      %s45 = sshll.u32 [#allocation7], 4
      %s46 = int_to_ptr.vmem [resolvable:$true] %s45
      %51 = dma.hbm_to_vmem [thread:$0]  %s3, 2048, %s46, [#allocation6], 128, 128, 8
    $region17: #{tpu_custom_call.1} parent=1 // pred_fallthru
      _
    // Predicated region
    $region18: #{tpu_custom_call.1} parent=1 // pred_check
      _
    $region19: #{tpu_custom_call.1} parent=1 // pred_check_branch
      %53 = sbr.rel (0) target = $region21
    $region20: #{tpu_custom_call.1} parent=1 // pred_region
      _
    $region21: #{tpu_custom_call.1} parent=1 // pred_fallthru
      _
    // Predicated region
    $region22: #{tpu_custom_call.1} parent=1 // pred_check
      _
    $region23: #{tpu_custom_call.1} parent=1 // pred_check_branch
      %55 = sbr.rel (0) target = $region25
    $region24: #{tpu_custom_call.1} parent=1 // pred_region
      _
    $region25: #{tpu_custom_call.1} parent=1 // pred_fallthru
      _
    // Predicated region
    $region26: #{tpu_custom_call.1} parent=1 // pred_check
      _
    $region27: #{tpu_custom_call.1} parent=1 // pred_check_branch
      %57 = sbr.rel (0) target = $region29
    $region28: #{tpu_custom_call.1} parent=1 // pred_region
      %58 = dma.done [#allocation4], 256
    $region29: #{tpu_custom_call.1} parent=1 // pred_fallthru
      _
    // Predicated region
    $region30: #{tpu_custom_call.1} parent=1 // pred_check
      _
    $region31: #{tpu_custom_call.1} parent=1 // pred_check_branch
      %60 = sbr.rel (0) target = $region33
    $region32: #{tpu_custom_call.1} parent=1 // pred_region
      %61 = dma.done [#allocation6], 1024
    $region33: #{tpu_custom_call.1} parent=1 // pred_fallthru
      _
    // Predicated region
    $region34: #{tpu_custom_call.1} parent=1 // pred_check
      _
    $region35: #{tpu_custom_call.1} parent=1 // pred_check_branch
      %63 = sbr.rel (0) target = $region37
    $region36: #{tpu_custom_call.1} parent=1 // pred_region
      %64 = dma.done [#allocation6], 2048
    $region37: #{tpu_custom_call.1} parent=1 // pred_fallthru
      _
    %v65 = vld [vmem:[#allocation3] sm:$0xff]
    %v66 = vld [vmem:[#allocation3 + $0x8] sm:$0xff]
    %v67 = vld [vmem:[#allocation5] sm:$0xff]
    %v68 = vld [vmem:[#allocation5 + $0x8] sm:$0xff]
    %v69 = vld [vmem:[#allocation5 + $0x10] sm:$0xff]
    %v70 = vld [vmem:[#allocation5 + $0x18] sm:$0xff]
    %v71 = vld [vmem:[#allocation5 + $0x20] sm:$0xff]
    %v72 = vld [vmem:[#allocation5 + $0x28] sm:$0xff]
    %v73 = vld [vmem:[#allocation5 + $0x30] sm:$0x3]
    %v74 = vld [vmem:[#allocation5 + $0x38] sm:$0x3]
    %v75 = vld [vmem:[%s2] sm:$0x3]
    %v77 = vlaneseq
    %v78 = vshrl.u32 %v77, 7
    %v79 = vsub.s32 0, %v78
    %v80 = vrot.slane %v75, %v79
    %v81 = vlaneseq
    %v82 = vshrl.u32 %v81, 7
    %v83 = vsub.s32 1, %v82
    %v84 = vrot.slane %v75, %v83
    %vm87 = vcmask 211968
    %v89 = vsel %vm87, %v65, 0
    %v92 = vsel %vm87, %v66, 0
    %vm94 = vcmask 1041408
    %v96 = vsel %vm94, %v73, 0
    %v99 = vsel %vm94, %v74, 0
    %101 = vmatprep.subr.mxu0 0.0
    %102 = vmatpush1.msra.mxu0 0.0
    %103 = vmatprep.subr.mxu0 0.0
    %104 = vmatpush1.msra.mxu0 0.0
    %105 = vmatprep.subr.mxu0 0.0
    %106 = vmatpush1.msra.mxu0 0.0
    %107 = vmatprep.subr.mxu0 0.0
    %108 = vmatpush1.msra.mxu0 0.0
    %109 = vmatprep.subr.mxu0 0.0
    %110 = vmatpush1.msra.mxu0 0.0
    %111 = vmatprep.subr.mxu0 0.0
    %112 = vmatpush1.msra.mxu0 0.0
    %113 = vmatprep.subr.mxu0 0.0
    %114 = vmatpush1.msra.mxu0 0.0
    %115 = vmatprep.subr.mxu0 0.0
    %116 = vmatpush1.msra.mxu0 0.0
    %117 = vmatprep.subr.mxu0 0.0
    %118 = vmatpush1.msra.mxu0 0.0
    %119 = vmatprep.subr.mxu0 0.0
    %120 = vmatpush1.msra.mxu0 0.0
    %121 = vmatprep.subr.mxu0 0.0
    %122 = vmatpush1.msra.mxu0 0.0
    %123 = vmatprep.subr.mxu0 0.0
    %124 = vmatpush1.msra.mxu0 0.0
    %125 = vmatprep.subr.mxu0 %v99
    %126 = vmatpush1.msra.mxu0 %v96
    %127 = vmatprep.subr.mxu0 %v72
    %128 = vmatpush1.msra.mxu0 %v71
    %129 = vmatprep.subr.mxu0 %v70
    %130 = vmatpush1.msra.mxu0 %v69
    %131 = vmatprep.subr.mxu0 %v68
    %132 = vmatpush1.msra.mxu0 %v67
    %133 = vmatprep.subr.mxu0 0.0
    %134 = vmatpush2.msra.mxu0 0.0
    %135 = vmatprep.subr.mxu0 0.0
    %136 = vmatpush2.msra.mxu0 0.0
    %137 = vmatprep.subr.mxu0 0.0
    %138 = vmatpush2.msra.mxu0 0.0
    %139 = vmatprep.subr.mxu0 0.0
    %140 = vmatpush2.msra.mxu0 0.0
    %141 = vmatprep.subr.mxu0 0.0
    %142 = vmatpush2.msra.mxu0 0.0
    %143 = vmatprep.subr.mxu0 0.0
    %144 = vmatpush2.msra.mxu0 0.0
    %145 = vmatprep.subr.mxu0 0.0
    %146 = vmatpush2.msra.mxu0 0.0
    %147 = vmatprep.subr.mxu0 0.0
    %148 = vmatpush2.msra.mxu0 0.0
    %149 = vmatprep.subr.mxu0 0.0
    %150 = vmatpush2.msra.mxu0 0.0
    %151 = vmatprep.subr.mxu0 0.0
    %152 = vmatpush2.msra.mxu0 0.0
    %153 = vmatprep.subr.mxu0 0.0
    %154 = vmatpush2.msra.mxu0 0.0
    %155 = vmatprep.subr.mxu0 0.0
    %156 = vmatpush2.msra.mxu0 0.0
    %157 = vmatprep.subr.mxu0 0.0
    %158 = vmatpush2.msra.mxu0 0.0
    %159 = vmatprep.subr.mxu0 0.0
    %160 = vmatpush2.msra.mxu0 0.0
    %161 = vmatprep.subr.mxu0 0.0
    %162 = vmatpush2.msra.mxu0 0.0
    %163 = vmatprep.subr.mxu0 0.0
    %164 = vmatpush2.msra.mxu0 0.0
    %165 = vmatprep.mubr.f32.mxu0 0.0
    %166 = vmatmul.mubr.f32.gmra.mxu0 %v89
    %v167 = vpop.f32.mrf.mxu0
    %v168 = vadd.f32 %v80, %v167
    %v169 = vpop.f32.mrf.mxu0
    %v170 = vadd.f32 %v84, %v169
    %171 = vmatprep.mubr.f32.mxu0 0.0
    %172 = vmatmul.mubr.f32.gmra.mxu0 %v92
    %v173 = vpop.f32.mrf.mxu0
    %v174 = vadd.f32 %v80, %v173
    %v175 = vpop.f32.mrf.mxu0
    %v176 = vadd.f32 %v84, %v175
    %177 = vdwg.mxu0
    %v178 = vmax.f32 %v168, 0.0
    %v179 = vmax.f32 %v174, 0.0
    %v180 = vld [vmem:[#allocation7] sm:$0xff]
    %v181 = vld [vmem:[#allocation7 + $0x8] sm:$0xff]
    %v182 = vld [vmem:[#allocation7 + $0x10] sm:$0xff]
    %v183 = vld [vmem:[#allocation7 + $0x18] sm:$0xff]
    %v184 = vld [vmem:[#allocation7 + $0x20] sm:$0xff]
    %v185 = vld [vmem:[#allocation7 + $0x28] sm:$0xff]
    %v186 = vld [vmem:[#allocation7 + $0x30] sm:$0xff]
    %v187 = vld [vmem:[#allocation7 + $0x38] sm:$0xff]
    %v188 = vld [vmem:[#allocation7 + $0x40] sm:$0xff]
    %v189 = vld [vmem:[#allocation7 + $0x48] sm:$0xff]
    %v190 = vld [vmem:[#allocation7 + $0x50] sm:$0xff]
    %v191 = vld [vmem:[#allocation7 + $0x58] sm:$0xff]
    %v192 = vld [vmem:[#allocation7 + $0x60] sm:$0xff]
    %v193 = vld [vmem:[#allocation7 + $0x68] sm:$0xff]
    %v194 = vld [vmem:[#allocation7 + $0x70] sm:$0xff]
    %v195 = vld [vmem:[#allocation7 + $0x78] sm:$0xff]
    %196 = vmatprep.subr.mxu0 0.0
    %197 = vmatpush1.msra.mxu0 %v195
    %198 = vmatprep.subr.mxu0 0.0
    %199 = vmatpush1.msra.mxu0 %v194
    %200 = vmatprep.subr.mxu0 0.0
    %201 = vmatpush1.msra.mxu0 %v193
    %202 = vmatprep.subr.mxu0 0.0
    %203 = vmatpush1.msra.mxu0 %v192
    %204 = vmatprep.subr.mxu0 0.0
    %205 = vmatpush1.msra.mxu0 %v191
    %206 = vmatprep.subr.mxu0 0.0
    %207 = vmatpush1.msra.mxu0 %v190
    %208 = vmatprep.subr.mxu0 0.0
    %209 = vmatpush1.msra.mxu0 %v189
    %210 = vmatprep.subr.mxu0 0.0
    %211 = vmatpush1.msra.mxu0 %v188
    %212 = vmatprep.subr.mxu0 0.0
    %213 = vmatpush1.msra.mxu0 %v187
    %214 = vmatprep.subr.mxu0 0.0
    %215 = vmatpush1.msra.mxu0 %v186
    %216 = vmatprep.subr.mxu0 0.0
    %217 = vmatpush1.msra.mxu0 %v185
    %218 = vmatprep.subr.mxu0 0.0
    %219 = vmatpush1.msra.mxu0 %v184
    %220 = vmatprep.subr.mxu0 0.0
    %221 = vmatpush1.msra.mxu0 %v183
    %222 = vmatprep.subr.mxu0 0.0
    %223 = vmatpush1.msra.mxu0 %v182
    %224 = vmatprep.subr.mxu0 0.0
    %225 = vmatpush1.msra.mxu0 %v181
    %226 = vmatprep.subr.mxu0 0.0
    %227 = vmatpush1.msra.mxu0 %v180
    %228 = vmatprep.subr.mxu0 0.0
    %229 = vmatpush2.msra.mxu0 0.0
    %230 = vmatprep.subr.mxu0 0.0
    %231 = vmatpush2.msra.mxu0 0.0
    %232 = vmatprep.subr.mxu0 0.0
    %233 = vmatpush2.msra.mxu0 0.0
    %234 = vmatprep.subr.mxu0 0.0
    %235 = vmatpush2.msra.mxu0 0.0
    %236 = vmatprep.subr.mxu0 0.0
    %237 = vmatpush2.msra.mxu0 0.0
    %238 = vmatprep.subr.mxu0 0.0
    %239 = vmatpush2.msra.mxu0 0.0
    %240 = vmatprep.subr.mxu0 0.0
    %241 = vmatpush2.msra.mxu0 0.0
    %242 = vmatprep.subr.mxu0 0.0
    %243 = vmatpush2.msra.mxu0 0.0
    %244 = vmatprep.subr.mxu0 0.0
    %245 = vmatpush2.msra.mxu0 0.0
    %246 = vmatprep.subr.mxu0 0.0
    %247 = vmatpush2.msra.mxu0 0.0
    %248 = vmatprep.subr.mxu0 0.0
    %249 = vmatpush2.msra.mxu0 0.0
    %250 = vmatprep.subr.mxu0 0.0
    %251 = vmatpush2.msra.mxu0 0.0
    %252 = vmatprep.subr.mxu0 0.0
    %253 = vmatpush2.msra.mxu0 0.0
    %254 = vmatprep.subr.mxu0 0.0
    %255 = vmatpush2.msra.mxu0 0.0
    %256 = vmatprep.subr.mxu0 0.0
    %257 = vmatpush2.msra.mxu0 0.0
    %258 = vmatprep.subr.mxu0 0.0
    %259 = vmatpush2.msra.mxu0 0.0
    %260 = vmatprep.mubr.f32.mxu0 0.0
    %261 = vmatmul.mubr.f32.gmra.mxu0 %v178
    %v262 = vpop.f32.mrf.mxu0
    %v263 = vadd.f32 %v170, %v262
    %v264 = vpop.f32.mrf.mxu0
    %265 = vmatprep.mubr.f32.mxu0 0.0
    %266 = vmatmul.mubr.f32.gmra.mxu0 %v179
    %v267 = vpop.f32.mrf.mxu0
    %v268 = vadd.f32 %v176, %v267
    %v269 = vpop.f32.mrf.mxu0
    %270 = vdwg.mxu0
    %v271 = vmax.f32 %v263, 0.0
    %v272 = vmax.f32 %v268, 0.0
    %v273 = vld [vmem:[%s4] sm:$0x1]
    %v275 = vlaneseq
    %v276 = vshrl.u32 %v275, 7
    %v277 = vsub.s32 0, %v276
    %v278 = vrot.slane %v273, %v277
    %v280 = vmul.f32 %v271, %v278
    %v281 = vmul.f32 %v272, %v278
    %282 = vadd.xlane.f32.xlu0 %v280
    %v283 = vpop.xlane.xlu0 %282
    %284 = vadd.xlane.f32.xlu0 %v281
    %v285 = vpop.xlane.xlu0 %284
    %s286 = sld [smem:[#allocation2]]
    %v287 = vstv %s286
    %v288 = vadd.f32 %v283, %v287
    %v289 = vadd.f32 %v285, %v287
    %vm290 = vcmask 7168
    %291 = vst.msk [vmem:[%s6] sm:$0xff] %vm290, %v288
    %292 = vst.msk [vmem:[%s6 + $0x8] sm:$0xff] %vm290, %v289
    // Predicated region
    $region38: #{tpu_custom_call.1} parent=1 // pred_check
      _
    $region39: #{tpu_custom_call.1} parent=1 // pred_check_branch
      %294 = sbr.rel (0) target = $region41
    $region40: #{tpu_custom_call.1} parent=1 // pred_region
      _
    $region41: #{tpu_custom_call.1} parent=1 // pred_fallthru
      _
    // Predicated region
    $region42: #{tpu_custom_call.1} parent=1 // pred_check
      _
    $region43: #{tpu_custom_call.1} parent=1 // pred_check_branch
      %296 = sbr.rel (0) target = $region45
    $region44: #{tpu_custom_call.1} parent=1 // pred_region
      _
    $region45: #{tpu_custom_call.1} parent=1 // pred_fallthru
      _
    %297 = vsyncpa [#allocation4], 1
    %298 = vsyncpa [#allocation6], 1

</llo_original>
